<compile_context>
chip_gen: v7x
topology: tpu7x:2x2x1
jax: 0.10.0
libtpu: 0.0.40
codegen_flags: <defaults>
</compile_context>

<pallas_src>
import functools

import jax
import jax.numpy as jnp
from jax.experimental import pallas as pl
from jax.experimental.pallas import tpu as pltpu

IN_DIM = 64
HID_DIM = 128
OUT_DIM = 64

_SUBLANE = 8            # f32 sublane multiple for the batch tile
_MAX_TILE = 4096        # keeps working set well under v5e's 16 MiB scoped VMEM
_SPLIT_THRESHOLD = 256  # above this, force >= 2 grid steps (v7x megacore)


def _round_up(n, m):
    return ((n + m - 1) // m) * m


def _mlp_kernel(x_ref, w1_ref, b1_ref, w2_ref, b2_ref, w3_ref, b3_ref, o_ref):
    # x streams in as f32; cast to bf16 on the VPU (hidden under the DMA) so
    # the MXU sees bf16 operands while accumulation / bias / ReLU stay in f32.
    x_bf = x_ref[...].astype(jnp.bfloat16)
    h1 = jnp.dot(x_bf, w1_ref[...], preferred_element_type=jnp.float32)
    h1 = jnp.maximum(h1 + b1_ref[...], 0.0)
    h2 = jnp.dot(h1.astype(jnp.bfloat16), w2_ref[...],
                 preferred_element_type=jnp.float32)
    h2 = jnp.maximum(h2 + b2_ref[...], 0.0)
    out = jnp.dot(h2.astype(jnp.bfloat16), w3_ref[...],
                  preferred_element_type=jnp.float32)
    o_ref[...] = (out + b3_ref[...]).astype(o_ref.dtype)


def _pick_tile(B, batch_tile):
    tile = min(batch_tile, _MAX_TILE, _round_up(B, _SUBLANE))
    tile = max(_SUBLANE, _round_up(tile, _SUBLANE))
    # For large batches make sure the grid has >= 2 steps so the "parallel"
    # batch axis can shard across both TensorCores on v7x.
    if B >= _SPLIT_THRESHOLD and tile >= B:
        tile = _round_up((B + 1) // 2, _SUBLANE)
    return tile


@functools.partial(jax.jit, static_argnames=("batch_tile",))
def chess_model_forward(x, params, batch_tile=2048):
    """x: (B, 64) float32.  params: w1/w2/w3 bf16 (in, out); b1/b2/b3 f32 (1, out)."""
    B = x.shape[0]
    tile = _pick_tile(B, batch_tile)
    grid = (pl.cdiv(B, tile),)

    # Batch-only grid.  Ragged last block is masked by Pallas (no pad / slice
    # passes over HBM).  Weights/biases use constant index_maps -> VMEM-resident.
    x_spec = pl.BlockSpec((tile, IN_DIM), lambda i: (i, 0))
    w1_spec = pl.BlockSpec((IN_DIM, HID_DIM), lambda i: (0, 0))
    b1_spec = pl.BlockSpec((1, HID_DIM), lambda i: (0, 0))
    w2_spec = pl.BlockSpec((HID_DIM, OUT_DIM), lambda i: (0, 0))
    b2_spec = pl.BlockSpec((1, OUT_DIM), lambda i: (0, 0))
    w3_spec = pl.BlockSpec((OUT_DIM, OUT_DIM), lambda i: (0, 0))
    b3_spec = pl.BlockSpec((1, OUT_DIM), lambda i: (0, 0))
    o_spec = pl.BlockSpec((tile, OUT_DIM), lambda i: (i, 0))

    return pl.pallas_call(
        _mlp_kernel,
        out_shape=jax.ShapeDtypeStruct((B, OUT_DIM), jnp.float32),
        grid_spec=pltpu.PrefetchScalarGridSpec(
            num_scalar_prefetch=0,
            grid=grid,
            in_specs=[x_spec, w1_spec, b1_spec, w2_spec, b2_spec,
                      w3_spec, b3_spec],
            out_specs=o_spec,
        ),
        compiler_params=pltpu.CompilerParams(
            dimension_semantics=("parallel",),
        ),
    )(x, params["w1"], params["b1"], params["w2"], params["b2"],
      params["w3"], params["b3"])


def init_params(key):
    """PyTorch-style nn.Linear init, stored transposed as (in, out).

    Weights are stored in bf16 once here (MXU operands); biases stay f32 and
    are added to the f32 accumulator inside the kernel.
    """
    k1, k2, k3, k4, k5, k6 = jax.random.split(key, 6)

    def uni(k, shape, fan_in, dtype):
        bound = 1.0 / jnp.sqrt(fan_in)
        return jax.random.uniform(k, shape, jnp.float32, -bound, bound).astype(dtype)

    return {
        "w1": uni(k1, (IN_DIM, HID_DIM), IN_DIM, jnp.bfloat16),
        "b1": uni(k2, (1, HID_DIM), IN_DIM, jnp.float32),
        "w2": uni(k3, (HID_DIM, OUT_DIM), HID_DIM, jnp.bfloat16),
        "b2": uni(k4, (1, OUT_DIM), HID_DIM, jnp.float32),
        "w3": uni(k5, (OUT_DIM, OUT_DIM), OUT_DIM, jnp.bfloat16),
        "b3": uni(k6, (1, OUT_DIM), OUT_DIM, jnp.float32),
    }


def _reference_forward_bf16(x, params):
    """Emulates the kernel's bf16-operand / f32-accumulate matmul path."""
    bf = jnp.bfloat16
    h1 = jnp.dot(x.astype(bf), params["w1"],
                 preferred_element_type=jnp.float32) + params["b1"]
    h1 = jnp.maximum(h1, 0.0)
    h2 = jnp.dot(h1.astype(bf), params["w2"],
                 preferred_element_type=jnp.float32) + params["b2"]
    h2 = jnp.maximum(h2, 0.0)
    return jnp.dot(h2.astype(bf), params["w3"],
                   preferred_element_type=jnp.float32) + params["b3"]


def _reference_forward_f32(x, params):
    """Full-f32 reference (weights upcast); loose tolerance vs bf16 MXU path."""
    f32 = jnp.float32
    h1 = jnp.maximum(x @ params["w1"].astype(f32) + params["b1"], 0.0)
    h2 = jnp.maximum(h1 @ params["w2"].astype(f32) + params["b2"], 0.0)
    return h2 @ params["w3"].astype(f32) + params["b3"]


if __name__ == "__main__":
    key = jax.random.PRNGKey(0)
    pkey, xkey, xkey2 = jax.random.split(key, 3)

    params = init_params(pkey)

    # Small batch of "board" vectors: (batch=8, 64 squares).
    x = jax.random.normal(xkey, (8, IN_DIM), jnp.float32)
    out = jax.block_until_ready(chess_model_forward(x, params))
    assert out.shape == (8, OUT_DIM)
    assert jnp.allclose(out, _reference_forward_bf16(x, params),
                        atol=1e-2, rtol=1e-2)
    assert jnp.allclose(out, _reference_forward_f32(x, params),
                        atol=5e-2, rtol=5e-2)

    # Non-divisible batch: ragged last grid block handled by Pallas masking
    # (no pad / slice HBM passes) and a multi-step parallel grid.
    x2 = jax.random.normal(xkey2, (300, IN_DIM), jnp.float32)
    out2 = jax.block_until_ready(chess_model_forward(x2, params, batch_tile=128))
    assert out2.shape == (300, OUT_DIM)
    assert jnp.allclose(out2, _reference_forward_bf16(x2, params),
                        atol=1e-2, rtol=1e-2)

    print("KERNEL_OK")
</pallas_src>

<mosaic_0001>
module attributes {stable_mosaic.version = 11 : i64} {
  func.func @_mlp_kernel(%arg0: i32, %arg1: memref<8x64xf32, #tpu.memory_space<vmem>>, %arg2: memref<64x128xbf16, #tpu.memory_space<vmem>>, %arg3: memref<1x128xf32, #tpu.memory_space<vmem>>, %arg4: memref<128x64xbf16, #tpu.memory_space<vmem>>, %arg5: memref<1x64xf32, #tpu.memory_space<vmem>>, %arg6: memref<64x64xbf16, #tpu.memory_space<vmem>>, %arg7: memref<1x64xf32, #tpu.memory_space<vmem>>, %arg8: memref<8x64xf32, #tpu.memory_space<vmem>>) attributes {dimension_semantics = [#tpu.dimension_semantics<parallel>], iteration_bounds = array<i64: 1>, scalar_prefetch = 0 : i64, scratch_operands = 0 : i64, tpu.core_type = #tpu.core_type<tc>, window_params = [{transform_indices = @transform_0, window_bounds = array<i64: 8, 64>}, {pipeline_mode = #tpu.pipeline_mode<synchronous>, transform_indices = @transform_1, window_bounds = array<i64: 64, 128>}, {pipeline_mode = #tpu.pipeline_mode<synchronous>, transform_indices = @transform_2, window_bounds = array<i64: 1, 128>}, {pipeline_mode = #tpu.pipeline_mode<synchronous>, transform_indices = @transform_3, window_bounds = array<i64: 128, 64>}, {pipeline_mode = #tpu.pipeline_mode<synchronous>, transform_indices = @transform_4, window_bounds = array<i64: 1, 64>}, {pipeline_mode = #tpu.pipeline_mode<synchronous>, transform_indices = @transform_5, window_bounds = array<i64: 64, 64>}, {pipeline_mode = #tpu.pipeline_mode<synchronous>, transform_indices = @transform_6, window_bounds = array<i64: 1, 64>}, {transform_indices = @transform_7, window_bounds = array<i64: 8, 64>}]} {
    %c0 = arith.constant 0 : index
    %c0_0 = arith.constant 0 : index
    %0 = vector.load %arg1[%c0, %c0_0] : memref<8x64xf32, #tpu.memory_space<vmem>>, vector<8x64xf32>
    %1 = arith.truncf %0 : vector<8x64xf32> to vector<8x64xbf16>
    %c0_1 = arith.constant 0 : index
    %c0_2 = arith.constant 0 : index
    %2 = vector.load %arg2[%c0_1, %c0_2] : memref<64x128xbf16, #tpu.memory_space<vmem>>, vector<64x128xbf16>
    %cst = arith.constant dense<0.000000e+00> : vector<8x128xf32>
    %3 = tpu.matmul %1, %2, %cst {dimension_numbers = #tpu.dot_dimension_numbers<[1], [0], [0], [1], [0, 0, 1, 1], [], []>} : vector<8x64xbf16>, vector<64x128xbf16>, vector<8x128xf32> -> vector<8x128xf32>
    %c0_3 = arith.constant 0 : index
    %c0_4 = arith.constant 0 : index
    %4 = vector.load %arg3[%c0_3, %c0_4] : memref<1x128xf32, #tpu.memory_space<vmem>>, vector<1x128xf32>
    %5 = vector.broadcast %4 : vector<1x128xf32> to vector<8x128xf32>
    %6 = arith.addf %3, %5 : vector<8x128xf32>
    %cst_5 = arith.constant 0.000000e+00 : f32
    %7 = vector.broadcast %cst_5 : f32 to vector<8x128xf32>
    %8 = arith.maximumf %6, %7 : vector<8x128xf32>
    %9 = arith.truncf %8 : vector<8x128xf32> to vector<8x128xbf16>
    %c0_6 = arith.constant 0 : index
    %c0_7 = arith.constant 0 : index
    %10 = vector.load %arg4[%c0_6, %c0_7] : memref<128x64xbf16, #tpu.memory_space<vmem>>, vector<128x64xbf16>
    %cst_8 = arith.constant dense<0.000000e+00> : vector<8x64xf32>
    %11 = tpu.matmul %9, %10, %cst_8 {dimension_numbers = #tpu.dot_dimension_numbers<[1], [0], [0], [1], [0, 0, 1, 1], [], []>} : vector<8x128xbf16>, vector<128x64xbf16>, vector<8x64xf32> -> vector<8x64xf32>
    %c0_9 = arith.constant 0 : index
    %c0_10 = arith.constant 0 : index
    %12 = vector.load %arg5[%c0_9, %c0_10] : memref<1x64xf32, #tpu.memory_space<vmem>>, vector<1x64xf32>
    %13 = vector.broadcast %12 : vector<1x64xf32> to vector<8x64xf32>
    %14 = arith.addf %11, %13 : vector<8x64xf32>
    %cst_11 = arith.constant 0.000000e+00 : f32
    %15 = vector.broadcast %cst_11 : f32 to vector<8x64xf32>
    %16 = arith.maximumf %14, %15 : vector<8x64xf32>
    %17 = arith.truncf %16 : vector<8x64xf32> to vector<8x64xbf16>
    %c0_12 = arith.constant 0 : index
    %c0_13 = arith.constant 0 : index
    %18 = vector.load %arg6[%c0_12, %c0_13] : memref<64x64xbf16, #tpu.memory_space<vmem>>, vector<64x64xbf16>
    %cst_14 = arith.constant dense<0.000000e+00> : vector<8x64xf32>
    %19 = tpu.matmul %17, %18, %cst_14 {dimension_numbers = #tpu.dot_dimension_numbers<[1], [0], [0], [1], [0, 0, 1, 1], [], []>} : vector<8x64xbf16>, vector<64x64xbf16>, vector<8x64xf32> -> vector<8x64xf32>
    %c0_15 = arith.constant 0 : index
    %c0_16 = arith.constant 0 : index
    %20 = vector.load %arg7[%c0_15, %c0_16] : memref<1x64xf32, #tpu.memory_space<vmem>>, vector<1x64xf32>
    %21 = vector.broadcast %20 : vector<1x64xf32> to vector<8x64xf32>
    %22 = arith.addf %19, %21 : vector<8x64xf32>
    %c0_17 = arith.constant 0 : index
    %c0_18 = arith.constant 0 : index
    %23 = vector.load %arg8[%c0_17, %c0_18] : memref<8x64xf32, #tpu.memory_space<vmem>>, vector<8x64xf32>
    tpu.vector_store %arg8[%c0_17, %c0_18], %22 {strides = array<i32>} : memref<8x64xf32, #tpu.memory_space<vmem>>, vector<8x64xf32>,
    return
  }
  func.func @transform_0(%arg0: i32) -> (i32, i32) {
    %c0_i32 = arith.constant 0 : i32
    %c0_i32_0 = arith.constant 0 : i32
    return %arg0, %c0_i32 : i32, i32
  }
  func.func @transform_1(%arg0: i32) -> (i32, i32) {
    %c0_i32 = arith.constant 0 : i32
    %c0_i32_0 = arith.constant 0 : i32
    %c0_i32_1 = arith.constant 0 : i32
    return %c0_i32, %c0_i32_0 : i32, i32
  }
  func.func @transform_2(%arg0: i32) -> (i32, i32) {
    %c0_i32 = arith.constant 0 : i32
    %c0_i32_0 = arith.constant 0 : i32
    %c0_i32_1 = arith.constant 0 : i32
    return %c0_i32, %c0_i32_0 : i32, i32
  }
  func.func @transform_3(%arg0: i32) -> (i32, i32) {
    %c0_i32 = arith.constant 0 : i32
    %c0_i32_0 = arith.constant 0 : i32
    %c0_i32_1 = arith.constant 0 : i32
    return %c0_i32, %c0_i32_0 : i32, i32
  }
  func.func @transform_4(%arg0: i32) -> (i32, i32) {
    %c0_i32 = arith.constant 0 : i32
    %c0_i32_0 = arith.constant 0 : i32
    %c0_i32_1 = arith.constant 0 : i32
    return %c0_i32, %c0_i32_0 : i32, i32
  }
  func.func @transform_5(%arg0: i32) -> (i32, i32) {
    %c0_i32 = arith.constant 0 : i32
    %c0_i32_0 = arith.constant 0 : i32
    %c0_i32_1 = arith.constant 0 : i32
    return %c0_i32, %c0_i32_0 : i32, i32
  }
  func.func @transform_6(%arg0: i32) -> (i32, i32) {
    %c0_i32 = arith.constant 0 : i32
    %c0_i32_0 = arith.constant 0 : i32
    %c0_i32_1 = arith.constant 0 : i32
    return %c0_i32, %c0_i32_0 : i32, i32
  }
  func.func @transform_7(%arg0: i32) -> (i32, i32) {
    %c0_i32 = arith.constant 0 : i32
    %c0_i32_0 = arith.constant 0 : i32
    return %arg0, %c0_i32 : i32, i32
  }
}

</mosaic_0001>

<llo_original>
// kernel: chess_model_forward.1
$region0: #{chess_model_forward.1}
  #allocation0 [shape = 'u32[]', space=smem, size = 0x4, offset = 0x4, fixed_abs, tag = 'smem constant byte address 0x4 - core index']
  #allocation1 [shape = 'u32[144,128]{1,0:T(1,128)}', space=vmem, size = 0x12000, scoped, tag = 'internal scratch']
  %s0 = inlined_call_operand.vmem [shape: f32[8,64], index: 0, kind: input, shape index: {}]
  %s1 = inlined_call_operand.vmem [shape: bf16[64,128], index: 1, kind: input, shape index: {}]
  %s2 = inlined_call_operand.vmem [shape: f32[1,128], index: 2, kind: input, shape index: {}]
  %s3 = inlined_call_operand.vmem [shape: bf16[128,64], index: 3, kind: input, shape index: {}]
  %s4 = inlined_call_operand.vmem [shape: f32[1,64], index: 4, kind: input, shape index: {}]
  %s5 = inlined_call_operand.vmem [shape: bf16[64,64], index: 5, kind: input, shape index: {}]
  %s6 = inlined_call_operand.vmem [shape: f32[1,64], index: 6, kind: input, shape index: {}]
  %s7 = inlined_call_operand.hbm [shape: f32[8,64], index: 7, kind: output, shape index: {}]
  %s8 = sld [smem:[#allocation0]]
  $region38: #{chess_model_forward.1} parent=0
    _
  %s10 = ssub.s32 1, %s8
  %s11 = scalar_select 0, %s10, %s8
  $region1: #{chess_model_forward.1} parent=0
    #allocation2 [shape = 'u8[4096]{0}', space=vmem, size = 0x1000, scoped, tag = 'output window, operand 0, single buffered']
    #allocation3 [shape = 's32[1]{0}', space=sflag, size = 0x4, scoped, tag = 'scoped memory for chess_model_forward.1']
    %12 = vsyncpa [#allocation3], 0
    // Predicated region
    $region2: #{chess_model_forward.1} parent=1 // pred_check
      _
    $region3: #{chess_model_forward.1} parent=1 // pred_check_branch
      %14 = sbr.rel (0) target = $region5
    $region4: #{chess_model_forward.1} parent=1 // pred_region
      _
    $region5: #{chess_model_forward.1} parent=1 // pred_fallthru
      _
    // Predicated region
    $region6: #{chess_model_forward.1} parent=1 // pred_check
      _
    $region7: #{chess_model_forward.1} parent=1 // pred_check_branch
      %16 = sbr.rel (0) target = $region9
    $region8: #{chess_model_forward.1} parent=1 // pred_region
      _
    $region9: #{chess_model_forward.1} parent=1 // pred_fallthru
      _
    // Predicated region
    $region10: #{chess_model_forward.1} parent=1 // pred_check
      _
    $region11: #{chess_model_forward.1} parent=1 // pred_check_branch
      %18 = sbr.rel (0) target = $region13
    $region12: #{chess_model_forward.1} parent=1 // pred_region
      _
    $region13: #{chess_model_forward.1} parent=1 // pred_fallthru
      _
    // Predicated region
    $region14: #{chess_model_forward.1} parent=1 // pred_check
      _
    $region15: #{chess_model_forward.1} parent=1 // pred_check_branch
      %20 = sbr.rel (0) target = $region17
    $region16: #{chess_model_forward.1} parent=1 // pred_region
      _
    $region17: #{chess_model_forward.1} parent=1 // pred_fallthru
      _
    // Predicated region
    $region18: #{chess_model_forward.1} parent=1 // pred_check
      _
    $region19: #{chess_model_forward.1} parent=1 // pred_check_branch
      %22 = sbr.rel (0) target = $region21
    $region20: #{chess_model_forward.1} parent=1 // pred_region
      _
    $region21: #{chess_model_forward.1} parent=1 // pred_fallthru
      _
    // Predicated region
    $region22: #{chess_model_forward.1} parent=1 // pred_check
      _
    $region23: #{chess_model_forward.1} parent=1 // pred_check_branch
      %24 = sbr.rel (0) target = $region25
    $region24: #{chess_model_forward.1} parent=1 // pred_region
      _
    $region25: #{chess_model_forward.1} parent=1 // pred_fallthru
      _
    // Predicated region
    $region26: #{chess_model_forward.1} parent=1 // pred_check
      _
    $region27: #{chess_model_forward.1} parent=1 // pred_check_branch
      %26 = sbr.rel (0) target = $region29
    $region28: #{chess_model_forward.1} parent=1 // pred_region
      _
    $region29: #{chess_model_forward.1} parent=1 // pred_fallthru
      _
    %v28 = vld [vmem:[%s0] sm:$0xff]
    %v29 = vpack.c.bf16 %v28, %v28
    %v30 = vld [vmem:[%s1] sm:$0xf]
    %v31 = vld [vmem:[%s1 + $0x4] sm:$0xf]
    %v32 = vld [vmem:[%s1 + $0x8] sm:$0xf]
    %v33 = vld [vmem:[%s1 + $0xc] sm:$0xf]
    %v34 = vld [vmem:[%s1 + $0x10] sm:$0xf]
    %v35 = vld [vmem:[%s1 + $0x14] sm:$0xf]
    %v36 = vld [vmem:[%s1 + $0x18] sm:$0xf]
    %v37 = vld [vmem:[%s1 + $0x1c] sm:$0xf]
    %v38 = vld [vmem:[%s2] sm:$0x1]
    %v40 = vlaneseq
    %v41 = vshrl.u32 %v40, 7
    %v42 = vsub.s32 0, %v41
    %v43 = vrot.slane %v38, %v42
    %v53 = vunpack.c.l.b16 %v30
    %v54 = vunpack.c.l.b16 %v31
    %v55 = vunpack.c.l.b16 %v32
    %v56 = vunpack.c.l.b16 %v33
    %v57 = vunpack.c.l.b16 %v34
    %v58 = vunpack.c.l.b16 %v35
    %v59 = vunpack.c.l.b16 %v36
    %v60 = vunpack.c.l.b16 %v37
    %v61 = vpack.c.b16 %v54, %v53
    %v62 = vpack.c.b16 %v56, %v55
    %v63 = vpack.c.b16 %v58, %v57
    %v64 = vpack.c.b16 %v60, %v59
    %vm69 = vcmask 523264
    %v71 = vsel %vm69, %v29, 0
    %73 = vmatprep.subr.bf16.mxu0 0
    %74 = vmatpush1.bf16.msra.mxu0 %v61
    %75 = vmatprep.subr.bf16.mxu0 0
    %76 = vmatpush1.bf16.msra.mxu0 %v62
    %77 = vmatprep.subr.bf16.mxu0 0
    %78 = vmatpush1.bf16.msra.mxu0 %v63
    %79 = vmatprep.subr.bf16.mxu0 0
    %80 = vmatpush1.bf16.msra.mxu0 %v64
    %81 = vmatprep.subr.bf16.mxu0 0
    %82 = vmatpush1.bf16.msra.mxu0 0
    %83 = vmatprep.subr.bf16.mxu0 0
    %84 = vmatpush1.bf16.msra.mxu0 0
    %85 = vmatprep.subr.bf16.mxu0 0
    %86 = vmatpush1.bf16.msra.mxu0 0
    %87 = vmatprep.subr.bf16.mxu0 0
    %88 = vmatpush1.bf16.msra.mxu0 0
    %89 = vmatprep.subr.bf16.mxu0 0
    %90 = vmatpush1.bf16.msra.mxu0 0
    %91 = vmatprep.subr.bf16.mxu0 0
    %92 = vmatpush1.bf16.msra.mxu0 0
    %93 = vmatprep.subr.bf16.mxu0 0
    %94 = vmatpush1.bf16.msra.mxu0 0
    %95 = vmatprep.subr.bf16.mxu0 0
    %96 = vmatpush1.bf16.msra.mxu0 0
    %97 = vmatprep.subr.bf16.mxu0 0
    %98 = vmatpush1.bf16.msra.mxu0 0
    %99 = vmatprep.subr.bf16.mxu0 0
    %100 = vmatpush1.bf16.msra.mxu0 0
    %101 = vmatprep.subr.bf16.mxu0 0
    %102 = vmatpush1.bf16.msra.mxu0 0
    %103 = vmatprep.subr.bf16.mxu0 0
    %104 = vmatpush1.bf16.msra.mxu0 0
    %105 = vmatprep.mubr.bf16.mxu0 0
    %106 = vmatmul.mubr.bf16.gmra.mrb[0].mxu0 %v71
    %v107 = vpop.f32.mrb[0].mxu0
    %v108 = vadd.f32 %v43, %v107
    %v109 = vpop.f32.mrb[0].mxu0
    %v110 = vpop.f32.mrb[0].mxu0
    %v111 = vpop.f32.mrb[0].mxu0
    %112 = vdwg.mxu0
    %v113 = vmax.f32 %v108, 0.0
    %v114 = vpack.c.bf16 %v113, %v113
    %v115 = vld [vmem:[%s3] sm:$0xf]
    %v116 = vld [vmem:[%s3 + $0x4] sm:$0xf]
    %v117 = vld [vmem:[%s3 + $0x8] sm:$0xf]
    %v118 = vld [vmem:[%s3 + $0xc] sm:$0xf]
    %v119 = vld [vmem:[%s3 + $0x10] sm:$0xf]
    %v120 = vld [vmem:[%s3 + $0x14] sm:$0xf]
    %v121 = vld [vmem:[%s3 + $0x18] sm:$0xf]
    %v122 = vld [vmem:[%s3 + $0x1c] sm:$0xf]
    %v123 = vld [vmem:[%s3 + $0x20] sm:$0xf]
    %v124 = vld [vmem:[%s3 + $0x24] sm:$0xf]
    %v125 = vld [vmem:[%s3 + $0x28] sm:$0xf]
    %v126 = vld [vmem:[%s3 + $0x2c] sm:$0xf]
    %v127 = vld [vmem:[%s3 + $0x30] sm:$0xf]
    %v128 = vld [vmem:[%s3 + $0x34] sm:$0xf]
    %v129 = vld [vmem:[%s3 + $0x38] sm:$0xf]
    %v130 = vld [vmem:[%s3 + $0x3c] sm:$0xf]
    %v131 = vld [vmem:[%s4] sm:$0x1]
    %v133 = vlaneseq
    %v134 = vshrl.u32 %v133, 7
    %v135 = vsub.s32 0, %v134
    %v136 = vrot.slane %v131, %v135
    %v154 = vunpack.c.l.b16 %v115
    %v155 = vunpack.c.l.b16 %v116
    %v156 = vunpack.c.l.b16 %v117
    %v157 = vunpack.c.l.b16 %v118
    %v158 = vunpack.c.l.b16 %v119
    %v159 = vunpack.c.l.b16 %v120
    %v160 = vunpack.c.l.b16 %v121
    %v161 = vunpack.c.l.b16 %v122
    %v162 = vunpack.c.l.b16 %v123
    %v163 = vunpack.c.l.b16 %v124
    %v164 = vunpack.c.l.b16 %v125
    %v165 = vunpack.c.l.b16 %v126
    %v166 = vunpack.c.l.b16 %v127
    %v167 = vunpack.c.l.b16 %v128
    %v168 = vunpack.c.l.b16 %v129
    %v169 = vunpack.c.l.b16 %v130
    %v170 = vpack.c.b16 %v155, %v154
    %v171 = vpack.c.b16 %v157, %v156
    %v172 = vpack.c.b16 %v159, %v158
    %v173 = vpack.c.b16 %v161, %v160
    %v174 = vpack.c.b16 %v163, %v162
    %v175 = vpack.c.b16 %v165, %v164
    %v176 = vpack.c.b16 %v167, %v166
    %v177 = vpack.c.b16 %v169, %v168
    %186 = vmatprep.subr.bf16.mxu0 0
    %187 = vmatpush1.bf16.msra.mxu0 %v170
    %188 = vmatprep.subr.bf16.mxu0 0
    %189 = vmatpush1.bf16.msra.mxu0 %v171
    %190 = vmatprep.subr.bf16.mxu0 0
    %191 = vmatpush1.bf16.msra.mxu0 %v172
    %192 = vmatprep.subr.bf16.mxu0 0
    %193 = vmatpush1.bf16.msra.mxu0 %v173
    %194 = vmatprep.subr.bf16.mxu0 0
    %195 = vmatpush1.bf16.msra.mxu0 %v174
    %196 = vmatprep.subr.bf16.mxu0 0
    %197 = vmatpush1.bf16.msra.mxu0 %v175
    %198 = vmatprep.subr.bf16.mxu0 0
    %199 = vmatpush1.bf16.msra.mxu0 %v176
    %200 = vmatprep.subr.bf16.mxu0 0
    %201 = vmatpush1.bf16.msra.mxu0 %v177
    %202 = vmatprep.subr.bf16.mxu0 0
    %203 = vmatpush1.bf16.msra.mxu0 0
    %204 = vmatprep.subr.bf16.mxu0 0
    %205 = vmatpush1.bf16.msra.mxu0 0
    %206 = vmatprep.subr.bf16.mxu0 0
    %207 = vmatpush1.bf16.msra.mxu0 0
    %208 = vmatprep.subr.bf16.mxu0 0
    %209 = vmatpush1.bf16.msra.mxu0 0
    %210 = vmatprep.subr.bf16.mxu0 0
    %211 = vmatpush1.bf16.msra.mxu0 0
    %212 = vmatprep.subr.bf16.mxu0 0
    %213 = vmatpush1.bf16.msra.mxu0 0
    %214 = vmatprep.subr.bf16.mxu0 0
    %215 = vmatpush1.bf16.msra.mxu0 0
    %216 = vmatprep.subr.bf16.mxu0 0
    %217 = vmatpush1.bf16.msra.mxu0 0
    %218 = vmatprep.mubr.bf16.mxu0 0
    %219 = vmatmul.mubr.bf16.gmra.mrb[0].mxu0 %v114
    %v220 = vpop.f32.mrb[0].mxu0
    %v221 = vadd.f32 %v136, %v220
    %v222 = vpop.f32.mrb[0].mxu0
    %v223 = vpop.f32.mrb[0].mxu0
    %v224 = vpop.f32.mrb[0].mxu0
    %225 = vdwg.mxu0
    %v226 = vmax.f32 %v221, 0.0
    %v227 = vpack.c.bf16 %v226, %v226
    %v228 = vld [vmem:[%s5] sm:$0xf]
    %v229 = vld [vmem:[%s5 + $0x4] sm:$0xf]
    %v230 = vld [vmem:[%s5 + $0x8] sm:$0xf]
    %v231 = vld [vmem:[%s5 + $0xc] sm:$0xf]
    %v232 = vld [vmem:[%s5 + $0x10] sm:$0xf]
    %v233 = vld [vmem:[%s5 + $0x14] sm:$0xf]
    %v234 = vld [vmem:[%s5 + $0x18] sm:$0xf]
    %v235 = vld [vmem:[%s5 + $0x1c] sm:$0xf]
    %v236 = vld [vmem:[%s6] sm:$0x1]
    %v238 = vlaneseq
    %v239 = vshrl.u32 %v238, 7
    %v240 = vsub.s32 0, %v239
    %v241 = vrot.slane %v236, %v240
    %v251 = vunpack.c.l.b16 %v228
    %v252 = vunpack.c.l.b16 %v229
    %v253 = vunpack.c.l.b16 %v230
    %v254 = vunpack.c.l.b16 %v231
    %v255 = vunpack.c.l.b16 %v232
    %v256 = vunpack.c.l.b16 %v233
    %v257 = vunpack.c.l.b16 %v234
    %v258 = vunpack.c.l.b16 %v235
    %v259 = vpack.c.b16 %v252, %v251
    %v260 = vpack.c.b16 %v254, %v253
    %v261 = vpack.c.b16 %v256, %v255
    %v262 = vpack.c.b16 %v258, %v257
    %v268 = vsel %vm69, %v227, 0
    %270 = vmatprep.subr.bf16.mxu0 0
    %271 = vmatpush1.bf16.msra.mxu0 %v259
    %272 = vmatprep.subr.bf16.mxu0 0
    %273 = vmatpush1.bf16.msra.mxu0 %v260
    %274 = vmatprep.subr.bf16.mxu0 0
    %275 = vmatpush1.bf16.msra.mxu0 %v261
    %276 = vmatprep.subr.bf16.mxu0 0
    %277 = vmatpush1.bf16.msra.mxu0 %v262
    %278 = vmatprep.subr.bf16.mxu0 0
    %279 = vmatpush1.bf16.msra.mxu0 0
    %280 = vmatprep.subr.bf16.mxu0 0
    %281 = vmatpush1.bf16.msra.mxu0 0
    %282 = vmatprep.subr.bf16.mxu0 0
    %283 = vmatpush1.bf16.msra.mxu0 0
    %284 = vmatprep.subr.bf16.mxu0 0
    %285 = vmatpush1.bf16.msra.mxu0 0
    %286 = vmatprep.subr.bf16.mxu0 0
    %287 = vmatpush1.bf16.msra.mxu0 0
    %288 = vmatprep.subr.bf16.mxu0 0
    %289 = vmatpush1.bf16.msra.mxu0 0
    %290 = vmatprep.subr.bf16.mxu0 0
    %291 = vmatpush1.bf16.msra.mxu0 0
    %292 = vmatprep.subr.bf16.mxu0 0
    %293 = vmatpush1.bf16.msra.mxu0 0
    %294 = vmatprep.subr.bf16.mxu0 0
    %295 = vmatpush1.bf16.msra.mxu0 0
    %296 = vmatprep.subr.bf16.mxu0 0
    %297 = vmatpush1.bf16.msra.mxu0 0
    %298 = vmatprep.subr.bf16.mxu0 0
    %299 = vmatpush1.bf16.msra.mxu0 0
    %300 = vmatprep.subr.bf16.mxu0 0
    %301 = vmatpush1.bf16.msra.mxu0 0
    %302 = vmatprep.mubr.bf16.mxu0 0
    %303 = vmatmul.mubr.bf16.gmra.mrb[0].mxu0 %v268
    %v304 = vpop.f32.mrb[0].mxu0
    %v305 = vadd.f32 %v241, %v304
    %v306 = vpop.f32.mrb[0].mxu0
    %v307 = vpop.f32.mrb[0].mxu0
    %v308 = vpop.f32.mrb[0].mxu0
    %309 = vdwg.mxu0
    %310 = vst.msk [vmem:[#allocation2] sm:$0xff] %vm69, %v305
    // Predicated region
    $region30: #{chess_model_forward.1} parent=1 // pred_check
      _
    $region31: #{chess_model_forward.1} parent=1 // pred_check_branch
      %312 = sbr.rel (0) target = $region33
    $region32: #{chess_model_forward.1} parent=1 // pred_region
      %s314 = ssub.s32 128, 128
      %315 = vsyncadd [#allocation3], %s314
      %s317 = sshll.u32 [#allocation2], 4
      %s318 = int_to_ptr.vmem [resolvable:$true] %s317
      %320 = dma.vmem_to_hbm [thread:$0]  %s318, 128, %s7, [#allocation3]
    $region33: #{chess_model_forward.1} parent=1 // pred_fallthru
      _
    // Predicated region
    $region34: #{chess_model_forward.1} parent=1 // pred_check
      _
    $region35: #{chess_model_forward.1} parent=1 // pred_check_branch
      %322 = sbr.rel (0) target = $region37
    $region36: #{chess_model_forward.1} parent=1 // pred_region
      %323 = dma.done [#allocation3], 128
    $region37: #{chess_model_forward.1} parent=1 // pred_fallthru
      _
    %324 = vsyncpa [#allocation3], 1

</llo_original>
